<compile_context>
chip_gen: v7x
topology: tpu7x:2x2x1
jax: 0.10.0
libtpu: 0.0.40
codegen_flags: <defaults>
</compile_context>

<pallas_src>
import jax
import jax.numpy as jnp
from jax.experimental import pallas as pl
from jax.experimental.pallas import tpu as pltpu


def _linear1x1_scalar_kernel(x_ref, wb_ref, o_ref):
    # All refs live in SMEM -> pure scalar-unit work, no vector load/store.
    # x_ref : (1,) f32  -- the single input element
    # wb_ref: (2,) f32  -- packed [weight, bias]
    # o_ref : (1,) f32  -- the single output element
    o_ref[0] = x_ref[0] * wb_ref[0] + wb_ref[1]


def linear1x1_pallas(x, weight, bias):
    """torch.nn.functional.linear for the degenerate (B=1, F_in=1, F_out=1) case."""
    B, f_in = x.shape
    f_out, f_in_w = weight.shape
    assert (B, f_in, f_out, f_in_w) == (1, 1, 1, 1), (
        "This kernel is specialized to the (1,1) linear in the reference "
        "module; larger layers should use a tiled MXU matmul instead."
    )
    # Pack weight and bias into a single scalar SMEM operand: [w, b].
    wb = jnp.concatenate([weight.reshape(1), bias.reshape(1)]).astype(x.dtype)
    out = pl.pallas_call(
        _linear1x1_scalar_kernel,
        out_shape=jax.ShapeDtypeStruct((1,), x.dtype),
        in_specs=[
            pl.BlockSpec(memory_space=pltpu.MemorySpace.SMEM),  # x scalar
            pl.BlockSpec(memory_space=pltpu.MemorySpace.SMEM),  # packed [w, b]
        ],
        out_specs=pl.BlockSpec(memory_space=pltpu.MemorySpace.SMEM),
    )(x.reshape(1), wb)
    return out.reshape(B, f_out)


class ModelPallas:
    """JAX/Pallas port of the PyTorch Model (returns v1, matching the ref)."""

    def __init__(self, key):
        k0, k1, k2, k3 = jax.random.split(key, 4)
        # torch.nn.Linear(1, 1) init: U(-1/sqrt(fan_in), 1/sqrt(fan_in)).
        # NOTE: this equals U(-1, 1) only because fan_in == 1 here.
        self.w0 = jax.random.uniform(k0, (1, 1), jnp.float32, -1.0, 1.0)
        self.b0 = jax.random.uniform(k1, (1,), jnp.float32, -1.0, 1.0)
        self.w1 = jax.random.uniform(k2, (1, 1), jnp.float32, -1.0, 1.0)
        self.b1 = jax.random.uniform(k3, (1,), jnp.float32, -1.0, 1.0)

    def __call__(self, x1):
        v1 = linear1x1_pallas(x1, self.w0, self.b0)
        # v2 = linear_1(v1); v3 = tanh(v2): dead code w.r.t. the returned
        # value in the reference forward, so they are intentionally omitted.
        return v1


if __name__ == "__main__":
    key = jax.random.PRNGKey(0)
    k_in, k_params = jax.random.split(key)

    # x1 = torch.randn(1, 1)
    x1 = jax.random.normal(k_in, (1, 1), dtype=jnp.float32)

    model = ModelPallas(k_params)
    out = model(x1)
    out = jax.block_until_ready(out)

    # Reference check in plain JAX.
    ref = x1 @ model.w0.T + model.b0
    assert out.shape == (1, 1)
    assert jnp.allclose(out, ref, atol=1e-6), (out, ref)

    print("KERNEL_OK")
</pallas_src>

<mosaic_0001>
module attributes {stable_mosaic.version = 11 : i64} {
  func.func @_linear1x1_scalar_kernel(%arg0: memref<1xf32, #tpu.memory_space<smem>>, %arg1: memref<2xf32, #tpu.memory_space<smem>>, %arg2: memref<1xf32, #tpu.memory_space<smem>>) attributes {dimension_semantics = [], scalar_prefetch = 0 : i64, scratch_operands = 0 : i64, tpu.core_type = #tpu.core_type<tc>} {
    %c0 = arith.constant 0 : index
    %0 = memref.load %arg0[%c0] : memref<1xf32, #tpu.memory_space<smem>>
    %c0_0 = arith.constant 0 : index
    %1 = memref.load %arg1[%c0_0] : memref<2xf32, #tpu.memory_space<smem>>
    %2 = arith.mulf %0, %1 : f32
    %c1 = arith.constant 1 : index
    %3 = memref.load %arg1[%c1] : memref<2xf32, #tpu.memory_space<smem>>
    %4 = arith.addf %2, %3 : f32
    %c0_1 = arith.constant 0 : index
    %5 = memref.load %arg2[%c0_1] : memref<1xf32, #tpu.memory_space<smem>>
    memref.store %4, %arg2[%c0_1] : memref<1xf32, #tpu.memory_space<smem>>
    return
  }
}

</mosaic_0001>

<llo_original>
// kernel: tpu_custom_call.1
$region0: #{tpu_custom_call.1}
  #allocation0 [shape = 'u32[]', space=smem, size = 0x4, offset = 0x4, fixed_abs, tag = 'smem constant byte address 0x4 - core index']
  #allocation1 [shape = 'u32[144,128]{1,0:T(1,128)}', space=vmem, size = 0x12000, scoped, tag = 'internal scratch']
  #allocation2 [shape = 'f32[1]{0:T(128)S(6)}', space=smem, size = 0x200, scoped, tag = 'scoped memory for tpu_custom_call.1']
  %s0 = inlined_call_operand.<no memory space> [shape: f32[1], index: 0, kind: input, shape index: {}]
  %s1 = inlined_call_operand.vmem [shape: f32[2], index: 1, kind: input, shape index: {}]
  %s2 = inlined_call_operand.hbm [shape: f32[1], index: 2, kind: output, shape index: {}]
  %s3 = sld [smem:[#allocation0]]
  $region22: #{tpu_custom_call.1} parent=0
    _
  %s5 = ssub.s32 1, %s3
  %s6 = scalar_select 0, %s5, %s3
  %7 = sst [smem:[#allocation2]] %s0
  $region1: #{tpu_custom_call.1} parent=0
    #allocation3 [shape = 'u8[512]{0}', space=smem, size = 0x200, scoped, tag = 'input window, operand 1, single buffered']
    #allocation4 [shape = 's32[1]{0}', space=sflag, size = 0x4, scoped, tag = 'scoped memory for tpu_custom_call.1']
    #allocation5 [shape = 's32[1]{0}', space=sflag, size = 0x4, scoped, tag = 'scoped memory for tpu_custom_call.1']
    #allocation6 [shape = 'u8[512]{0}', space=smem, size = 0x200, scoped, tag = 'output window, operand 0, single buffered']
    %8 = vsyncpa [#allocation5], 0
    %9 = vsyncpa [#allocation4], 0
    // Predicated region
    $region2: #{tpu_custom_call.1} parent=1 // pred_check
      _
    $region3: #{tpu_custom_call.1} parent=1 // pred_check_branch
      %11 = sbr.rel (0) target = $region5
    $region4: #{tpu_custom_call.1} parent=1 // pred_region
      _
    $region5: #{tpu_custom_call.1} parent=1 // pred_fallthru
      _
    // Predicated region
    $region6: #{tpu_custom_call.1} parent=1 // pred_check
      _
    $region7: #{tpu_custom_call.1} parent=1 // pred_check_branch
      %13 = sbr.rel (0) target = $region9
    $region8: #{tpu_custom_call.1} parent=1 // pred_region
      %s15 = ssub.s32 16, 16
      %16 = vsyncadd [#allocation5], %s15
      %s18 = sshll.u32 %s1, 4
      %s19 = int_to_ptr.vmem [resolvable:$true] %s18
      %21 = dma.vmem_to_smem %s19, 16, [#allocation3], [#allocation5]
    $region9: #{tpu_custom_call.1} parent=1 // pred_fallthru
      _
    // Predicated region
    $region10: #{tpu_custom_call.1} parent=1 // pred_check
      _
    $region11: #{tpu_custom_call.1} parent=1 // pred_check_branch
      %23 = sbr.rel (0) target = $region13
    $region12: #{tpu_custom_call.1} parent=1 // pred_region
      %24 = dma.done [#allocation5], 16
    $region13: #{tpu_custom_call.1} parent=1 // pred_fallthru
      _
    %25 = sfence
    %s26 = sld [smem:[#allocation2]]
    %s27 = sld [smem:[#allocation3]]
    %s28 = smul.f32 %s26, %s27
    %s29 = sld [smem:[#allocation3 + $0x1]]
    %s30 = sadd.f32 %s28, %s29
    %s31 = scalar_lea.smem [#allocation6], 0
    %32 = sst [smem:[%s31]] %s30
    // Predicated region
    $region14: #{tpu_custom_call.1} parent=1 // pred_check
      _
    $region15: #{tpu_custom_call.1} parent=1 // pred_check_branch
      %34 = sbr.rel (0) target = $region17
    $region16: #{tpu_custom_call.1} parent=1 // pred_region
      %s36 = ssub.s32 16, 16
      %37 = vsyncadd [#allocation4], %s36
      %40 = dma.smem_to_hbm [#allocation6], 16, %s2, [#allocation4]
    $region17: #{tpu_custom_call.1} parent=1 // pred_fallthru
      _
    // Predicated region
    $region18: #{tpu_custom_call.1} parent=1 // pred_check
      _
    $region19: #{tpu_custom_call.1} parent=1 // pred_check_branch
      %42 = sbr.rel (0) target = $region21
    $region20: #{tpu_custom_call.1} parent=1 // pred_region
      %43 = dma.done [#allocation4], 16
    $region21: #{tpu_custom_call.1} parent=1 // pred_fallthru
      _
    %44 = sfence
    %45 = vsyncpa [#allocation4], 1
    %46 = vsyncpa [#allocation5], 1

</llo_original>
